<compile_context>
chip_gen: v6e
topology: v6e:2x2x1
jax: 0.10.0
libtpu: 0.0.40
codegen_flags: <defaults>
</compile_context>

<pallas_src>
import functools

import jax
import jax.numpy as jnp
from jax.experimental import pallas as pl
from jax.experimental.pallas import tpu as pltpu


def _round_up(x, m):
    return (x + m - 1) // m * m


def _vmem_capacity_bytes():
    try:
        return int(pltpu.get_tpu_info().vmem_capacity_bytes)
    except Exception:
        return 64 * 1024 * 1024  # conservative fallback (v7x per-TC VMEM)


# ------------------------------------------------------------------ kernel 1
def _project_kernel(x_ref, w_ref, h_ref):
    # h = [x | 1] @ [W.T | e_degcol]: the appended ones-feature times the
    # one-hot weight row plants an exact 1.0 in the padded `deg_col` lane, so
    # the aggregation kernel gets the row degree for free from the MXU.
    h_ref[...] = jnp.dot(
        x_ref[...], w_ref[...], preferred_element_type=jnp.float32
    ).astype(h_ref.dtype)


# ------------------------------------------------------------------ kernel 2
def _gcn_agg_kernel(adj_ref, h_ref, b_ref, o_ref, *, tk, h_resident, deg_col):
    k = pl.program_id(1)

    @pl.when(k == 0)
    def _init():
        o_ref[...] = jnp.zeros_like(o_ref)

    adj = adj_ref[...].astype(jnp.bfloat16)   # int8 -> bf16 (VPU, hidden under DMA)
    if h_resident:
        start = pl.multiple_of(k * tk, tk)
        h_blk = h_ref[pl.ds(start, tk), :]    # h fully resident; slice current chunk
    else:
        h_blk = h_ref[...]
    # MXU: bf16 x bf16 -> f32, accumulated straight into the resident output block.
    o_ref[...] += jnp.dot(adj, h_blk, preferred_element_type=jnp.float32)

    @pl.when(k == pl.num_programs(1) - 1)
    def _finalize():
        acc = o_ref[...]
        # Row degree sits in the padded `deg_col` lane (adj @ ones == deg).
        col = jax.lax.broadcasted_iota(jnp.int32, acc.shape, dimension=1)
        deg = jnp.sum(jnp.where(col == deg_col, acc, 0.0), axis=-1, keepdims=True)
        # Guard keeps zero-padded rows finite. Real nodes carry self-loops
        # (per the PyTorch docstring) so deg >= 1 there and semantics match.
        deg = jnp.where(deg > 0.0, deg, 1.0)
        inv = pl.reciprocal(deg, approx=True)
        o_ref[...] = acc * inv + b_ref[...]


# ------------------------------------------------------------------ wrapper
def gcn_layer(node_feats, edge_index, weight, bias, num_nodes):
    """node_feats: [N, c_in] f32, edge_index: [2, E] int32,
    weight: [c_out, c_in] (nn.Linear layout), bias: [c_out]. Returns [N, c_out] f32."""
    N = int(num_nodes)
    c_in = node_feats.shape[1]
    c_out = weight.shape[0]

    # Lane-dense output columns plus at least one spare lane for the degree column.
    c_out_p = _round_up(c_out + 1, 128)
    deg_col = c_out

    # ---- per-generation tile sizing -----------------------------------------
    vmem_cap = _vmem_capacity_bytes()
    vmem_budget = min(vmem_cap * 3 // 4, 96 * 1024 * 1024)

    TK = min(2048, _round_up(N, 128))   # contraction tile (lanes)
    TM = min(1024, _round_up(N, 32))    # row tile (int8 sublane packing)
    while True:
        n_cols = _round_up(N, TK)
        n_rows = _round_up(N, TM)
        h_bytes = n_cols * c_out_p * 2                      # bf16
        h_resident = h_bytes <= 4 * 1024 * 1024
        use = (2 * TM * TK                                   # adj int8, double-buffered
               + (2 * h_bytes if h_resident else 2 * TK * c_out_p * 2)
               + 2 * TM * c_out_p * 4                        # f32 output, double-buffered
               + 2 * c_out_p * 4)                            # bias
        if use <= vmem_budget or (TM <= 256 and TK <= 512):
            break
        if TK >= 2 * TM and TK > 512:
            TK = max(128, _round_up(TK // 2, 128))
        elif TM > 256:
            TM = max(32, _round_up(TM // 2, 32))
        else:
            TK = max(128, _round_up(TK // 2, 128))

    TR = TK if TK <= 1024 else TK // 2  # projection row tile (always divides n_cols)

    # ---- plain-JAX glue -----------------------------------------------------
    # Dense adjacency scattered directly into int8 (edge multiplicities exact
    # up to 127 -- fine for simple graphs such as MUTAG).
    # TODO(synk): for genuinely sparse graphs, replace the dense-adj stream
    # with a CSR neighbor-gather kernel via PrefetchScalarGridSpec (O(E)
    # instead of O(N^2) HBM traffic).
    src, dst = edge_index[0], edge_index[1]
    adj = jnp.zeros((n_rows, n_cols), jnp.int8).at[src, dst].add(jnp.int8(1))

    # x augmented with a constant-one feature; w_t gets a matching one-hot row
    # so h[:, deg_col] == 1.0 exactly and the MXU produces row degrees.
    x = jnp.zeros((n_cols, c_in + 1), jnp.float32)
    x = x.at[:N, :c_in].set(node_feats.astype(jnp.float32))
    x = x.at[:, c_in].set(1.0)
    w_t = jnp.zeros((c_in + 1, c_out_p), jnp.float32)
    w_t = w_t.at[:c_in, :c_out].set(weight.T.astype(jnp.float32))
    w_t = w_t.at[c_in, deg_col].set(1.0)
    b2d = jnp.zeros((1, c_out_p), jnp.float32).at[:, :c_out].set(
        bias.astype(jnp.float32).reshape(1, c_out))

    # ---- kernel 1: projection h = [x|1] @ [W^T|e] (bf16, streamed by kernel 2)
    h = pl.pallas_call(
        _project_kernel,
        out_shape=jax.ShapeDtypeStruct((n_cols, c_out_p), jnp.bfloat16),
        grid=(n_cols // TR,),
        in_specs=[
            pl.BlockSpec((TR, c_in + 1), lambda i: (i, 0)),
            pl.BlockSpec((c_in + 1, c_out_p), lambda i: (0, 0)),
        ],
        out_specs=pl.BlockSpec((TR, c_out_p), lambda i: (i, 0)),
        compiler_params=pltpu.CompilerParams(
            dimension_semantics=("parallel",)),
    )(x, w_t)

    # ---- kernel 2: tiled adj @ h, degree from MXU lane, normalize + bias ----
    if h_resident:
        h_spec = pl.BlockSpec((n_cols, c_out_p), lambda i, k: (0, 0))
    else:
        h_spec = pl.BlockSpec((TK, c_out_p), lambda i, k: (k, 0))

    out = pl.pallas_call(
        functools.partial(_gcn_agg_kernel, tk=TK, h_resident=h_resident,
                          deg_col=deg_col),
        out_shape=jax.ShapeDtypeStruct((n_rows, c_out_p), jnp.float32),
        grid=(n_rows // TM, n_cols // TK),        # (row tiles, contraction tiles)
        in_specs=[
            pl.BlockSpec((TM, TK), lambda i, k: (i, k)),       # adj tile (int8)
            h_spec,                                            # h (resident or streamed)
            pl.BlockSpec((1, c_out_p), lambda i, k: (0, 0)),   # bias
        ],
        out_specs=pl.BlockSpec((TM, c_out_p), lambda i, k: (i, 0)),
        compiler_params=pltpu.CompilerParams(
            dimension_semantics=("parallel", "arbitrary"),
            vmem_limit_bytes=int(vmem_budget)),
    )(adj, h, b2d)

    return out[:N, :c_out]


def gcn_layer_ref(node_feats, edge_index, weight, bias, num_nodes):
    """Pure-JAX f32 reference matching the PyTorch forward."""
    N = num_nodes
    src, dst = edge_index[0], edge_index[1]
    adj = jnp.zeros((N, N), jnp.float32).at[src, dst].add(1.0)
    h = node_feats @ weight.T + bias
    out = adj @ h
    deg = adj.sum(-1, keepdims=True)
    return out / deg


if __name__ == "__main__":
    key = jax.random.PRNGKey(0)
    k1, k2, k3 = jax.random.split(key, 3)

    num_nodes, c_in, c_out = 16, 8, 32

    node_feats = jax.random.normal(k1, (num_nodes, c_in), jnp.float32)

    # nn.Linear(in_channels, out_channels): weight [c_out, c_in], bias [c_out]
    weight = jax.random.normal(k2, (c_out, c_in), jnp.float32) * (1.0 / jnp.sqrt(c_in))
    bias = jax.random.normal(k3, (c_out,), jnp.float32) * 0.1

    # Small directed graph: a ring plus self-loops (identity connections
    # assumed already added, matching the module's docstring).
    ring_src = jnp.arange(num_nodes, dtype=jnp.int32)
    ring_dst = (ring_src + 1) % num_nodes
    loops = jnp.arange(num_nodes, dtype=jnp.int32)
    src = jnp.concatenate([ring_src, loops])
    dst = jnp.concatenate([ring_dst, loops])
    edge_index = jnp.stack([src, dst])  # [2, E]

    out = gcn_layer(node_feats, edge_index, weight, bias, num_nodes)
    out = jax.block_until_ready(out)

    ref = gcn_layer_ref(node_feats, edge_index, weight, bias, num_nodes)
    assert out.shape == (num_nodes, c_out)
    # h is stored/streamed in bf16 (f32 accumulation) and 1/deg uses the EUP
    # approx reciprocal, so allow ~1e-2 deviation from the pure-f32 reference.
    assert jnp.allclose(out, ref, atol=2e-2, rtol=2e-2), "mismatch vs reference"

    print("KERNEL_OK")
</pallas_src>

<mosaic_0001>
module attributes {stable_mosaic.version = 11 : i64} {
  func.func @_project_kernel(%arg0: i32, %arg1: memref<128x9xf32, #tpu.memory_space<vmem>>, %arg2: memref<9x128xf32, #tpu.memory_space<vmem>>, %arg3: memref<128x128xbf16, #tpu.memory_space<vmem>>) attributes {dimension_semantics = [#tpu.dimension_semantics<parallel>], iteration_bounds = array<i64: 1>, scalar_prefetch = 0 : i64, scratch_operands = 0 : i64, tpu.core_type = #tpu.core_type<tc>, window_params = [{transform_indices = @transform_0, window_bounds = array<i64: 128, 9>}, {pipeline_mode = #tpu.pipeline_mode<synchronous>, transform_indices = @transform_1, window_bounds = array<i64: 9, 128>}, {transform_indices = @transform_2, window_bounds = array<i64: 128, 128>}]} {
    %c0 = arith.constant 0 : index
    %c0_0 = arith.constant 0 : index
    %0 = vector.load %arg1[%c0, %c0_0] : memref<128x9xf32, #tpu.memory_space<vmem>>, vector<128x9xf32>
    %c0_1 = arith.constant 0 : index
    %c0_2 = arith.constant 0 : index
    %1 = vector.load %arg2[%c0_1, %c0_2] : memref<9x128xf32, #tpu.memory_space<vmem>>, vector<9x128xf32>
    %cst = arith.constant dense<0.000000e+00> : vector<128x128xf32>
    %2 = tpu.matmul %0, %1, %cst {dimension_numbers = #tpu.dot_dimension_numbers<[1], [0], [0], [1], [0, 0, 1, 1], [], []>} : vector<128x9xf32>, vector<9x128xf32>, vector<128x128xf32> -> vector<128x128xf32>
    %3 = arith.truncf %2 : vector<128x128xf32> to vector<128x128xbf16>
    %c0_3 = arith.constant 0 : index
    %c0_4 = arith.constant 0 : index
    %4 = vector.load %arg3[%c0_3, %c0_4] : memref<128x128xbf16, #tpu.memory_space<vmem>>, vector<128x128xbf16>
    tpu.vector_store %arg3[%c0_3, %c0_4], %3 {strides = array<i32>} : memref<128x128xbf16, #tpu.memory_space<vmem>>, vector<128x128xbf16>,
    return
  }
  func.func @transform_0(%arg0: i32) -> (i32, i32) {
    %c0_i32 = arith.constant 0 : i32
    %c0_i32_0 = arith.constant 0 : i32
    return %arg0, %c0_i32 : i32, i32
  }
  func.func @transform_1(%arg0: i32) -> (i32, i32) {
    %c0_i32 = arith.constant 0 : i32
    %c0_i32_0 = arith.constant 0 : i32
    %c0_i32_1 = arith.constant 0 : i32
    return %c0_i32, %c0_i32_0 : i32, i32
  }
  func.func @transform_2(%arg0: i32) -> (i32, i32) {
    %c0_i32 = arith.constant 0 : i32
    %c0_i32_0 = arith.constant 0 : i32
    return %arg0, %c0_i32 : i32, i32
  }
}

</mosaic_0001>

<llo_original>
// kernel: tpu_custom_call.1
$region0: #{tpu_custom_call.1}
  #allocation0 [shape = 'u32[]', space=smem, size = 0x4, offset = 0x4, fixed_abs, tag = 'smem constant byte address 0x4 - core index']
  #allocation1 [shape = 'u32[144,128]{1,0:T(1,128)}', space=vmem, size = 0x12000, scoped, tag = 'internal scratch']
  %s0 = inlined_call_operand.vmem [shape: f32[128,9], index: 0, kind: input, shape index: {}]
  %s1 = inlined_call_operand.vmem [shape: f32[9,128], index: 1, kind: input, shape index: {}]
  %s2 = inlined_call_operand.hbm [shape: bf16[128,128], index: 2, kind: output, shape index: {}]
  %s3 = sld [smem:[#allocation0]]
  $region18: #{tpu_custom_call.1} parent=0
    _
  %s5 = ssub.s32 1, %s3
  %s6 = scalar_select 0, %s5, %s3
  $region1: #{tpu_custom_call.1} parent=0
    #allocation2 [shape = 'u8[32768]{0}', space=vmem, size = 0x8000, scoped, tag = 'output window, operand 0, single buffered']
    #allocation3 [shape = 's32[1]{0}', space=sflag, size = 0x4, scoped, tag = 'scoped memory for tpu_custom_call.1']
    %7 = vsyncpa [#allocation3], 0
    // Predicated region
    $region2: #{tpu_custom_call.1} parent=1 // pred_check
      _
    $region3: #{tpu_custom_call.1} parent=1 // pred_check_branch
      %9 = sbr.rel (0) target = $region5
    $region4: #{tpu_custom_call.1} parent=1 // pred_region
      _
    $region5: #{tpu_custom_call.1} parent=1 // pred_fallthru
      _
    // Predicated region
    $region6: #{tpu_custom_call.1} parent=1 // pred_check
      _
    $region7: #{tpu_custom_call.1} parent=1 // pred_check_branch
      %11 = sbr.rel (0) target = $region9
    $region8: #{tpu_custom_call.1} parent=1 // pred_region
      _
    $region9: #{tpu_custom_call.1} parent=1 // pred_fallthru
      _
    %v12 = vld [vmem:[%s0] sm:$0xff]
    %v13 = vld [vmem:[%s0 + $0x8] sm:$0xff]
    %v14 = vld [vmem:[%s0 + $0x10] sm:$0xff]
    %v15 = vld [vmem:[%s0 + $0x18] sm:$0xff]
    %v16 = vld [vmem:[%s0 + $0x20] sm:$0xff]
    %v17 = vld [vmem:[%s0 + $0x28] sm:$0xff]
    %v18 = vld [vmem:[%s0 + $0x30] sm:$0xff]
    %v19 = vld [vmem:[%s0 + $0x38] sm:$0xff]
    %v20 = vld [vmem:[%s0 + $0x40] sm:$0xff]
    %v21 = vld [vmem:[%s0 + $0x48] sm:$0xff]
    %v22 = vld [vmem:[%s0 + $0x50] sm:$0xff]
    %v23 = vld [vmem:[%s0 + $0x58] sm:$0xff]
    %v24 = vld [vmem:[%s0 + $0x60] sm:$0xff]
    %v25 = vld [vmem:[%s0 + $0x68] sm:$0xff]
    %v26 = vld [vmem:[%s0 + $0x70] sm:$0xff]
    %v27 = vld [vmem:[%s0 + $0x78] sm:$0xff]
    %v28 = vld [vmem:[%s1] sm:$0xff]
    %v29 = vld [vmem:[%s1 + $0x8] sm:$0x1]
    %vm30 = vcmask 72704
    %v32 = vsel %vm30, %v12, 0
    %v35 = vsel %vm30, %v13, 0
    %v38 = vsel %vm30, %v14, 0
    %v41 = vsel %vm30, %v15, 0
    %v44 = vsel %vm30, %v16, 0
    %v47 = vsel %vm30, %v17, 0
    %v50 = vsel %vm30, %v18, 0
    %v53 = vsel %vm30, %v19, 0
    %v56 = vsel %vm30, %v20, 0
    %v59 = vsel %vm30, %v21, 0
    %v62 = vsel %vm30, %v22, 0
    %v65 = vsel %vm30, %v23, 0
    %v68 = vsel %vm30, %v24, 0
    %v71 = vsel %vm30, %v25, 0
    %v74 = vsel %vm30, %v26, 0
    %v77 = vsel %vm30, %v27, 0
    %vm79 = vcmask 1040384
    %v81 = vsel %vm79, %v29, 0
    %83 = vmatprep.subr.mxu0 0.0
    %84 = vmatpush1.msra.mxu0 0.0
    %85 = vmatprep.subr.mxu0 0.0
    %86 = vmatpush1.msra.mxu0 0.0
    %87 = vmatprep.subr.mxu0 0.0
    %88 = vmatpush1.msra.mxu0 0.0
    %89 = vmatprep.subr.mxu0 0.0
    %90 = vmatpush1.msra.mxu0 0.0
    %91 = vmatprep.subr.mxu0 0.0
    %92 = vmatpush1.msra.mxu0 0.0
    %93 = vmatprep.subr.mxu0 0.0
    %94 = vmatpush1.msra.mxu0 0.0
    %95 = vmatprep.subr.mxu0 0.0
    %96 = vmatpush1.msra.mxu0 0.0
    %97 = vmatprep.subr.mxu0 0.0
    %98 = vmatpush1.msra.mxu0 0.0
    %99 = vmatprep.subr.mxu0 0.0
    %100 = vmatpush1.msra.mxu0 0.0
    %101 = vmatprep.subr.mxu0 0.0
    %102 = vmatpush1.msra.mxu0 0.0
    %103 = vmatprep.subr.mxu0 0.0
    %104 = vmatpush1.msra.mxu0 0.0
    %105 = vmatprep.subr.mxu0 0.0
    %106 = vmatpush1.msra.mxu0 0.0
    %107 = vmatprep.subr.mxu0 0.0
    %108 = vmatpush1.msra.mxu0 0.0
    %109 = vmatprep.subr.mxu0 0.0
    %110 = vmatpush1.msra.mxu0 0.0
    %111 = vmatprep.subr.mxu0 0.0
    %112 = vmatpush1.msra.mxu0 %v81
    %113 = vmatprep.subr.mxu0 0.0
    %114 = vmatpush1.msra.mxu0 %v28
    %115 = vmatprep.subr.mxu0 0.0
    %116 = vmatpush2.msra.mxu0 0.0
    %117 = vmatprep.subr.mxu0 0.0
    %118 = vmatpush2.msra.mxu0 0.0
    %119 = vmatprep.subr.mxu0 0.0
    %120 = vmatpush2.msra.mxu0 0.0
    %121 = vmatprep.subr.mxu0 0.0
    %122 = vmatpush2.msra.mxu0 0.0
    %123 = vmatprep.subr.mxu0 0.0
    %124 = vmatpush2.msra.mxu0 0.0
    %125 = vmatprep.subr.mxu0 0.0
    %126 = vmatpush2.msra.mxu0 0.0
    %127 = vmatprep.subr.mxu0 0.0
    %128 = vmatpush2.msra.mxu0 0.0
    %129 = vmatprep.subr.mxu0 0.0
    %130 = vmatpush2.msra.mxu0 0.0
    %131 = vmatprep.subr.mxu0 0.0
    %132 = vmatpush2.msra.mxu0 0.0
    %133 = vmatprep.subr.mxu0 0.0
    %134 = vmatpush2.msra.mxu0 0.0
    %135 = vmatprep.subr.mxu0 0.0
    %136 = vmatpush2.msra.mxu0 0.0
    %137 = vmatprep.subr.mxu0 0.0
    %138 = vmatpush2.msra.mxu0 0.0
    %139 = vmatprep.subr.mxu0 0.0
    %140 = vmatpush2.msra.mxu0 0.0
    %141 = vmatprep.subr.mxu0 0.0
    %142 = vmatpush2.msra.mxu0 0.0
    %143 = vmatprep.subr.mxu0 0.0
    %144 = vmatpush2.msra.mxu0 0.0
    %145 = vmatprep.subr.mxu0 0.0
    %146 = vmatpush2.msra.mxu0 0.0
    %147 = vmatprep.mubr.f32.mxu0 0.0
    %148 = vmatmul.mubr.f32.gmra.mxu0 %v32
    %v149 = vpop.f32.mrf.mxu0
    %v150 = vadd.f32 0.0, %v149
    %v151 = vpop.f32.mrf.mxu0
    %152 = vmatprep.mubr.f32.mxu0 0.0
    %153 = vmatmul.mubr.f32.gmra.mxu0 %v35
    %v154 = vpop.f32.mrf.mxu0
    %v155 = vadd.f32 0.0, %v154
    %v156 = vpop.f32.mrf.mxu0
    %157 = vmatprep.mubr.f32.mxu0 0.0
    %158 = vmatmul.mubr.f32.gmra.mxu0 %v38
    %v159 = vpop.f32.mrf.mxu0
    %v160 = vadd.f32 0.0, %v159
    %v161 = vpop.f32.mrf.mxu0
    %162 = vmatprep.mubr.f32.mxu0 0.0
    %163 = vmatmul.mubr.f32.gmra.mxu0 %v41
    %v164 = vpop.f32.mrf.mxu0
    %v165 = vadd.f32 0.0, %v164
    %v166 = vpop.f32.mrf.mxu0
    %167 = vmatprep.mubr.f32.mxu0 0.0
    %168 = vmatmul.mubr.f32.gmra.mxu0 %v44
    %v169 = vpop.f32.mrf.mxu0
    %v170 = vadd.f32 0.0, %v169
    %v171 = vpop.f32.mrf.mxu0
    %172 = vmatprep.mubr.f32.mxu0 0.0
    %173 = vmatmul.mubr.f32.gmra.mxu0 %v47
    %v174 = vpop.f32.mrf.mxu0
    %v175 = vadd.f32 0.0, %v174
    %v176 = vpop.f32.mrf.mxu0
    %177 = vmatprep.mubr.f32.mxu0 0.0
    %178 = vmatmul.mubr.f32.gmra.mxu0 %v50
    %v179 = vpop.f32.mrf.mxu0
    %v180 = vadd.f32 0.0, %v179
    %v181 = vpop.f32.mrf.mxu0
    %182 = vmatprep.mubr.f32.mxu0 0.0
    %183 = vmatmul.mubr.f32.gmra.mxu0 %v53
    %v184 = vpop.f32.mrf.mxu0
    %v185 = vadd.f32 0.0, %v184
    %v186 = vpop.f32.mrf.mxu0
    %187 = vmatprep.mubr.f32.mxu0 0.0
    %188 = vmatmul.mubr.f32.gmra.mxu0 %v56
    %v189 = vpop.f32.mrf.mxu0
    %v190 = vadd.f32 0.0, %v189
    %v191 = vpop.f32.mrf.mxu0
    %192 = vmatprep.mubr.f32.mxu0 0.0
    %193 = vmatmul.mubr.f32.gmra.mxu0 %v59
    %v194 = vpop.f32.mrf.mxu0
    %v195 = vadd.f32 0.0, %v194
    %v196 = vpop.f32.mrf.mxu0
    %197 = vmatprep.mubr.f32.mxu0 0.0
    %198 = vmatmul.mubr.f32.gmra.mxu0 %v62
    %v199 = vpop.f32.mrf.mxu0
    %v200 = vadd.f32 0.0, %v199
    %v201 = vpop.f32.mrf.mxu0
    %202 = vmatprep.mubr.f32.mxu0 0.0
    %203 = vmatmul.mubr.f32.gmra.mxu0 %v65
    %v204 = vpop.f32.mrf.mxu0
    %v205 = vadd.f32 0.0, %v204
    %v206 = vpop.f32.mrf.mxu0
    %207 = vmatprep.mubr.f32.mxu0 0.0
    %208 = vmatmul.mubr.f32.gmra.mxu0 %v68
    %v209 = vpop.f32.mrf.mxu0
    %v210 = vadd.f32 0.0, %v209
    %v211 = vpop.f32.mrf.mxu0
    %212 = vmatprep.mubr.f32.mxu0 0.0
    %213 = vmatmul.mubr.f32.gmra.mxu0 %v71
    %v214 = vpop.f32.mrf.mxu0
    %v215 = vadd.f32 0.0, %v214
    %v216 = vpop.f32.mrf.mxu0
    %217 = vmatprep.mubr.f32.mxu0 0.0
    %218 = vmatmul.mubr.f32.gmra.mxu0 %v74
    %v219 = vpop.f32.mrf.mxu0
    %v220 = vadd.f32 0.0, %v219
    %v221 = vpop.f32.mrf.mxu0
    %222 = vmatprep.mubr.f32.mxu0 0.0
    %223 = vmatmul.mubr.f32.gmra.mxu0 %v77
    %v224 = vpop.f32.mrf.mxu0
    %v225 = vadd.f32 0.0, %v224
    %v226 = vpop.f32.mrf.mxu0
    %227 = vdwg.mxu0
    %v228 = vpack.c.bf16 %v155, %v150
    %v229 = vpack.c.bf16 %v165, %v160
    %v230 = vpack.c.bf16 %v175, %v170
    %v231 = vpack.c.bf16 %v185, %v180
    %v232 = vpack.c.bf16 %v195, %v190
    %v233 = vpack.c.bf16 %v205, %v200
    %v234 = vpack.c.bf16 %v215, %v210
    %v235 = vpack.c.bf16 %v225, %v220
    %v244 = vunpack.c.l.b16 %v228
    %v245 = vunpack.c.h.b16 %v228
    %v246 = vunpack.c.l.b16 %v229
    %v247 = vunpack.c.h.b16 %v229
    %v248 = vunpack.c.l.b16 %v230
    %v249 = vunpack.c.h.b16 %v230
    %v250 = vunpack.c.l.b16 %v231
    %v251 = vunpack.c.h.b16 %v231
    %v252 = vunpack.c.l.b16 %v232
    %v253 = vunpack.c.h.b16 %v232
    %v254 = vunpack.c.l.b16 %v233
    %v255 = vunpack.c.h.b16 %v233
    %v256 = vunpack.c.l.b16 %v234
    %v257 = vunpack.c.h.b16 %v234
    %v258 = vunpack.c.l.b16 %v235
    %v259 = vunpack.c.h.b16 %v235
    %v260 = vpack.c.b16 %v244, %v244
    %v261 = vpack.c.b16 %v245, %v245
    %v262 = vpack.c.b16 %v246, %v246
    %v263 = vpack.c.b16 %v247, %v247
    %v264 = vpack.c.b16 %v248, %v248
    %v265 = vpack.c.b16 %v249, %v249
    %v266 = vpack.c.b16 %v250, %v250
    %v267 = vpack.c.b16 %v251, %v251
    %v268 = vpack.c.b16 %v252, %v252
    %v269 = vpack.c.b16 %v253, %v253
    %v270 = vpack.c.b16 %v254, %v254
    %v271 = vpack.c.b16 %v255, %v255
    %v272 = vpack.c.b16 %v256, %v256
    %v273 = vpack.c.b16 %v257, %v257
    %v274 = vpack.c.b16 %v258, %v258
    %v275 = vpack.c.b16 %v259, %v259
    %292 = vst [vmem:[#allocation2] sm:$0xf] %v260
    %293 = vst [vmem:[#allocation2 + $0x4] sm:$0xf] %v261
    %294 = vst [vmem:[#allocation2 + $0x8] sm:$0xf] %v262
    %295 = vst [vmem:[#allocation2 + $0xc] sm:$0xf] %v263
    %296 = vst [vmem:[#allocation2 + $0x10] sm:$0xf] %v264
    %297 = vst [vmem:[#allocation2 + $0x14] sm:$0xf] %v265
    %298 = vst [vmem:[#allocation2 + $0x18] sm:$0xf] %v266
    %299 = vst [vmem:[#allocation2 + $0x1c] sm:$0xf] %v267
    %300 = vst [vmem:[#allocation2 + $0x20] sm:$0xf] %v268
    %301 = vst [vmem:[#allocation2 + $0x24] sm:$0xf] %v269
    %302 = vst [vmem:[#allocation2 + $0x28] sm:$0xf] %v270
    %303 = vst [vmem:[#allocation2 + $0x2c] sm:$0xf] %v271
    %304 = vst [vmem:[#allocation2 + $0x30] sm:$0xf] %v272
    %305 = vst [vmem:[#allocation2 + $0x34] sm:$0xf] %v273
    %306 = vst [vmem:[#allocation2 + $0x38] sm:$0xf] %v274
    %307 = vst [vmem:[#allocation2 + $0x3c] sm:$0xf] %v275
    // Predicated region
    $region10: #{tpu_custom_call.1} parent=1 // pred_check
      _
    $region11: #{tpu_custom_call.1} parent=1 // pred_check_branch
      %309 = sbr.rel (0) target = $region13
    $region12: #{tpu_custom_call.1} parent=1 // pred_region
      %s311 = ssub.s32 1024, 1024
      %312 = vsyncadd [#allocation3], %s311
      %s313 = sshll.u32 [#allocation2], 4
      %s314 = int_to_ptr.vmem [resolvable:$true] %s313
      %319 = dma.vmem_to_hbm [thread:$0]  %s314, 1024, %s2, [#allocation3], 64, 64, 4
    $region13: #{tpu_custom_call.1} parent=1 // pred_fallthru
      _
    // Predicated region
    $region14: #{tpu_custom_call.1} parent=1 // pred_check
      _
    $region15: #{tpu_custom_call.1} parent=1 // pred_check_branch
      %321 = sbr.rel (0) target = $region17
    $region16: #{tpu_custom_call.1} parent=1 // pred_region
      %322 = dma.done [#allocation3], 1024
    $region17: #{tpu_custom_call.1} parent=1 // pred_fallthru
      _
    %323 = vsyncpa [#allocation3], 1

</llo_original>
